<compile_context>
chip_gen: v7x
topology: tpu7x:2x2x1
jax: 0.10.0
libtpu: 0.0.40
codegen_flags: <defaults>
</compile_context>

<pallas_src>
import jax
import jax.numpy as jnp
from jax.experimental import pallas as pl
from jax.experimental.pallas import tpu as pltpu


# ----------------------------------------------------------------------------
# Encoder GRU kernel (one direction, one layer), sequential over T.
# gx = x @ Wih + bih (+ bhh folded for r,z gates); only h @ Whh stays in the loop.
# ----------------------------------------------------------------------------
def gru_seq_kernel(gx_ref, m_ref, whh_ref, bhhn_ref, out_ref, hN_ref, h_scr):
    t = pl.program_id(0)
    H = h_scr.shape[1]

    @pl.when(t == 0)
    def _():
        h_scr[...] = jnp.zeros_like(h_scr)

    gx = gx_ref[0]                       # (B, 3H) precomputed input-gate projection
    h = h_scr[...]                       # (B, H)
    m = m_ref[0]                         # (B, 1) validity mask (1 valid / 0 pad)

    gh = jnp.dot(h, whh_ref[...], preferred_element_type=jnp.float32)   # (B, 3H)
    r = jax.nn.sigmoid(gx[:, 0:H] + gh[:, 0:H])
    z = jax.nn.sigmoid(gx[:, H:2 * H] + gh[:, H:2 * H])
    n = jnp.tanh(gx[:, 2 * H:] + r * (gh[:, 2 * H:] + bhhn_ref[...]))
    h_new = (1.0 - z) * n + z * h

    # packed-sequence semantics: padded steps emit 0 output and keep previous hidden
    h_upd = m * h_new + (1.0 - m) * h
    out_ref[0] = m * h_new
    h_scr[...] = h_upd

    @pl.when(t == pl.num_programs(0) - 1)
    def _():
        hN_ref[...] = h_upd


def run_gru(gx_tbg, mask_tb1, whh, bhh_n):
    T, B, G = gx_tbg.shape
    H = whh.shape[0]
    out, hN = pl.pallas_call(
        gru_seq_kernel,
        out_shape=(jax.ShapeDtypeStruct((T, B, H), jnp.float32),
                   jax.ShapeDtypeStruct((B, H), jnp.float32)),
        grid_spec=pltpu.PrefetchScalarGridSpec(
            num_scalar_prefetch=0,
            grid=(T,),
            in_specs=[
                pl.BlockSpec((1, B, G), lambda t: (t, 0, 0)),   # gx (per step)
                pl.BlockSpec((1, B, 1), lambda t: (t, 0, 0)),   # mask (per step, B*1 only)
                pl.BlockSpec((H, G), lambda t: (0, 0)),         # Whh (resident)
                pl.BlockSpec((1, H), lambda t: (0, 0)),         # bhh_n (resident)
            ],
            out_specs=[
                pl.BlockSpec((1, B, H), lambda t: (t, 0, 0)),
                pl.BlockSpec((B, H), lambda t: (0, 0)),
            ],
            scratch_shapes=[pltpu.VMEM((B, H), jnp.float32)],
        ),
        compiler_params=pltpu.CompilerParams(dimension_semantics=("arbitrary",)),
    )(gx_tbg, mask_tb1, whh, bhh_n)
    return out, hN


# ----------------------------------------------------------------------------
# Fused teacher-forced decoder: ONE pallas_call over all decode steps.
#   GRU cell -> dot attention over encoder output -> concat Linear + tanh ->
#   out Linear -> masked NLL from logits, accumulated across the grid.
# ----------------------------------------------------------------------------
def decoder_loop_kernel(gx_ref, h0_ref, enc_ref, whh_ref, bhhn_ref,
                        wc_ref, bc_ref, wo_ref, bo_ref, tgt_ref, msk_ref,
                        loss_ref, ntot_ref, h_scr):
    t = pl.program_id(0)
    H = h_scr.shape[1]

    @pl.when(t == 0)
    def _():
        h_scr[...] = h0_ref[...]
        loss_ref[...] = jnp.zeros_like(loss_ref)
        ntot_ref[...] = jnp.zeros_like(ntot_ref)

    gx = gx_ref[0]                       # (B, 3H) precomputed input-gate projection
    h = h_scr[...]                       # (B, H)
    enc = enc_ref[...]                   # (B, T, H) resident

    gh = jnp.dot(h, whh_ref[...], preferred_element_type=jnp.float32)   # (B, 3H)
    r = jax.nn.sigmoid(gx[:, 0:H] + gh[:, 0:H])
    z = jax.nn.sigmoid(gx[:, H:2 * H] + gh[:, H:2 * H])
    n = jnp.tanh(gx[:, 2 * H:] + r * (gh[:, 2 * H:] + bhhn_ref[...]))
    h_new = (1.0 - z) * n + z * h        # GRU output == new hidden (1 layer)
    h_scr[...] = h_new

    # global dot attention (Atten): energies = sum(enc * dec, dim=2); softmax over seq.
    # (At these tiny B/T/H the VPU form is cheapest; at scale switch to batched
    #  lax.dot_general so the contraction rides the MXU.)
    energies = jnp.sum(enc * h_new[:, None, :], axis=2)                  # (B, T)
    energies = energies - jnp.max(energies, axis=1, keepdims=True)
    e = jnp.exp(energies)
    attn = e * pl.reciprocal(jnp.sum(e, axis=1, keepdims=True), approx=True)
    context = jnp.sum(attn[:, :, None] * enc, axis=1)                    # (B, H)

    # concat([dec_out, context]) @ Wc + bc == dec_out @ Wc1 + context @ Wc2 + bc
    concat_out = jnp.tanh(
        jnp.dot(h_new, wc_ref[0], preferred_element_type=jnp.float32)
        + jnp.dot(context, wc_ref[1], preferred_element_type=jnp.float32)
        + bc_ref[...])
    logits = jnp.dot(concat_out, wo_ref[...], preferred_element_type=jnp.float32) + bo_ref[...]

    # masked NLL from logits: ce = logsumexp(logits) - logits[target]
    lmax = jnp.max(logits, axis=1, keepdims=True)
    lse = jnp.log(jnp.sum(jnp.exp(logits - lmax), axis=1, keepdims=True)) + lmax   # (B, 1)
    tgt = tgt_ref[0]                                                     # (B, 1) int32
    onehot = (jax.lax.broadcasted_iota(jnp.int32, logits.shape, 1) == tgt).astype(jnp.float32)
    picked = jnp.sum(logits * onehot, axis=1, keepdims=True)             # (B, 1)
    ce = lse - picked
    mf = msk_ref[0]                                                      # (B, 1)
    loss_ref[...] += jnp.sum(ce * mf, keepdims=True)                     # sum of masked CE
    ntot_ref[...] += jnp.sum(mf, keepdims=True)                          # n_Total


def run_decoder(gx_tbg, h0, enc_out, dec_params):
    n_steps, B, G = gx_tbg.shape
    H = h0.shape[1]
    T = enc_out.shape[1]
    V = dec_params["wo"].shape[1]
    bhh_n = dec_params["bhh"][:, 2 * H:]
    return pl.pallas_call(
        decoder_loop_kernel,
        out_shape=(jax.ShapeDtypeStruct((1, 1), jnp.float32),
                   jax.ShapeDtypeStruct((1, 1), jnp.float32)),
        grid_spec=pltpu.PrefetchScalarGridSpec(
            num_scalar_prefetch=0,
            grid=(n_steps,),
            in_specs=[
                pl.BlockSpec((1, B, G), lambda t: (t, 0, 0)),     # gx (per step)
                pl.BlockSpec((B, H), lambda t: (0, 0)),           # h0
                pl.BlockSpec((B, T, H), lambda t: (0, 0, 0)),     # enc_out (resident)
                pl.BlockSpec((H, G), lambda t: (0, 0)),           # Whh
                pl.BlockSpec((1, H), lambda t: (0, 0)),           # bhh_n
                pl.BlockSpec((2, H, H), lambda t: (0, 0, 0)),     # Wc (split halves)
                pl.BlockSpec((1, H), lambda t: (0, 0)),           # bc
                pl.BlockSpec((H, V), lambda t: (0, 0)),           # Wo
                pl.BlockSpec((1, V), lambda t: (0, 0)),           # bo
                pl.BlockSpec((1, B, 1), lambda t: (t, 0, 0)),     # targets (per step)
                pl.BlockSpec((1, B, 1), lambda t: (t, 0, 0)),     # mask (per step)
            ],
            out_specs=[
                pl.BlockSpec((1, 1), lambda t: (0, 0)),           # accumulated sum(ce*mask)
                pl.BlockSpec((1, 1), lambda t: (0, 0)),           # accumulated n_totals
            ],
            scratch_shapes=[pltpu.VMEM((B, H), jnp.float32)],
        ),
        compiler_params=pltpu.CompilerParams(dimension_semantics=("arbitrary",)),
    )(gx_tbg, h0, enc_out,
      dec_params["whh"], bhh_n, dec_params["wc"], dec_params["bc"],
      dec_params["wo"], dec_params["bo"],
      dec_params["_tgt_tb1"], dec_params["_msk_tb1"])


# ----------------------------------------------------------------------------
# Glue: hoisted input projections, bidirectional encoder, fused decoder loop.
# ----------------------------------------------------------------------------
def folded_input_gates(emb_bte, p, H):
    """x @ Wih, time-major (T,B,3H); bih+bhh folded for r,z, bih only for n."""
    bx = p["bih"] + jnp.concatenate(
        [p["bhh"][:, :2 * H], jnp.zeros((1, H), jnp.float32)], axis=1)
    return jnp.einsum("bte,eg->tbg", emb_bte, p["wih"]) + bx


def encoder_forward(tokens, lengths, params):
    B, T = tokens.shape
    H = params["enc_f"]["whh"].shape[0]

    emb = params["embedding"][tokens]                                   # (B, T, E)
    t_idx = jnp.arange(T)
    valid = (t_idx[None, :] < lengths[:, None]).astype(jnp.float32)     # (B, T)
    mask_tb1 = valid.T[:, :, None]                                      # (T, B, 1)

    # forward direction
    gx_f = folded_input_gates(emb, params["enc_f"], H)
    out_f, hN_f = run_gru(gx_f, mask_tb1, params["enc_f"]["whh"],
                          params["enc_f"]["bhh"][:, 2 * H:])

    # backward direction: reverse each sequence within its valid length
    rev_idx = jnp.where(t_idx[None, :] < lengths[:, None],
                        lengths[:, None] - 1 - t_idx[None, :],
                        t_idx[None, :])                                 # (B, T)
    emb_rev = jnp.take_along_axis(
        emb, jnp.broadcast_to(rev_idx[:, :, None], emb.shape), axis=1)
    gx_b = folded_input_gates(emb_rev, params["enc_b"], H)
    out_b_rev, _ = run_gru(gx_b, mask_tb1, params["enc_b"]["whh"],
                           params["enc_b"]["bhh"][:, 2 * H:])

    out_f = jnp.transpose(out_f, (1, 0, 2))                             # (B, T, H)
    out_b_rev = jnp.transpose(out_b_rev, (1, 0, 2))
    out_b = jnp.take_along_axis(
        out_b_rev, jnp.broadcast_to(rev_idx[:, :, None], out_b_rev.shape), axis=1)

    enc_out = out_f + out_b          # output[:, :, :H] + output[:, :, H:]
    # decoder_hidden = encoder_hidden[:decoder_num_layers] -> forward-direction final h
    return enc_out, hN_f


def seq2seq_forward(tokens, lengths, targets, params, max_target_len, sos_token=1):
    B = tokens.shape[0]
    H = params["dec"]["whh"].shape[0]

    enc_out, h_dec0 = encoder_forward(tokens, lengths, params)

    n_steps = min(max_target_len, targets.shape[1])
    tgt_steps = targets[:, :n_steps].astype(jnp.int32)                  # (B, n_steps)
    # teacher forcing fixed True: input_0 = SOS, input_t = target_{t-1}
    dec_in = jnp.concatenate([jnp.full((B, 1), sos_token, jnp.int32),
                              tgt_steps[:, :n_steps - 1]], axis=1)      # (B, n_steps)
    dec_emb = params["embedding"][dec_in]                               # (B, n_steps, E)
    gx_d = folded_input_gates(dec_emb, params["dec"], H)                # (n_steps, B, 3H)

    dec_params = dict(params["dec"])
    dec_params["_tgt_tb1"] = tgt_steps.T[:, :, None]                    # (n_steps, B, 1)
    dec_params["_msk_tb1"] = (tgt_steps > 0).astype(jnp.float32).T[:, :, None]

    loss_sum, ntot = run_decoder(gx_d, h_dec0, enc_out, dec_params)
    ls = loss_sum[0, 0]
    nt = ntot[0, 0]
    # loss_mean = sum_t(mask_loss_t * n_Total_t) / sum_t(n_Total_t), guarded against 0/0
    return jnp.where(nt > 0, ls / jnp.maximum(nt, 1.0), 0.0)


# ----------------------------------------------------------------------------
# Deterministic parameter init (shapes follow nn.Embedding / nn.GRU / nn.Linear,
# with GRU weights pre-packed as (E,3H)/(H,3H) in [r,z,n] gate order).
# ----------------------------------------------------------------------------
def init_gru_params(key, E, H, scale=0.1):
    k = jax.random.split(key, 4)
    return dict(
        wih=(jax.random.normal(k[0], (E, 3 * H)) * scale).astype(jnp.float32),
        whh=(jax.random.normal(k[1], (H, 3 * H)) * scale).astype(jnp.float32),
        bih=(jax.random.normal(k[2], (1, 3 * H)) * scale).astype(jnp.float32),
        bhh=(jax.random.normal(k[3], (1, 3 * H)) * scale).astype(jnp.float32),
    )


def init_params(key, V, E, H, scale=0.1):
    ks = jax.random.split(key, 8)
    dec = init_gru_params(ks[2], E, H, scale)
    dec["wc"] = (jax.random.normal(ks[3], (2, H, H)) * scale).astype(jnp.float32)  # Linear(2H,H)
    dec["bc"] = (jax.random.normal(ks[4], (1, H)) * scale).astype(jnp.float32)
    dec["wo"] = (jax.random.normal(ks[5], (H, V)) * scale).astype(jnp.float32)     # Linear(H,V)
    dec["bo"] = (jax.random.normal(ks[6], (1, V)) * scale).astype(jnp.float32)
    return dict(
        embedding=(jax.random.normal(ks[7], (V, E)) * scale).astype(jnp.float32),
        enc_f=init_gru_params(ks[0], E, H, scale),
        enc_b=init_gru_params(ks[1], E, H, scale),
        dec=dec,
    )


if __name__ == "__main__":
    B, T, E, H, V = 4, 8, 16, 32, 128
    max_target_len = 8
    key = jax.random.PRNGKey(0)
    ks = jax.random.split(key, 4)

    params = init_params(ks[0], V, E, H)

    # context batch, lengths sorted descending (as forward() expects), PAD token = 0
    lengths = jnp.array([8, 7, 6, 5], dtype=jnp.int32)
    tokens = jax.random.randint(ks[1], (B, T), 3, V, dtype=jnp.int32)
    tokens = jnp.where(jnp.arange(T)[None, :] < lengths[:, None], tokens, 0)

    # padded target batch (pad = 0 -> masked in loss)
    Tt = 6
    tgt_lens = jnp.array([6, 6, 5, 4], dtype=jnp.int32)
    targets = jax.random.randint(ks[2], (B, Tt), 3, V, dtype=jnp.int32)
    targets = jnp.where(jnp.arange(Tt)[None, :] < tgt_lens[:, None], targets, 0)

    loss_mean = seq2seq_forward(tokens, lengths, targets, params, max_target_len)
    loss_mean = jax.block_until_ready(loss_mean)
    assert jnp.isfinite(loss_mean)
    print("KERNEL_OK")
</pallas_src>

<mosaic_0001>
module attributes {stable_mosaic.version = 11 : i64} {
  func.func @gru_seq_kernel(%arg0: i32, %arg1: memref<1x4x96xf32, #tpu.memory_space<vmem>>, %arg2: memref<1x4x1xf32, #tpu.memory_space<vmem>>, %arg3: memref<32x96xf32, #tpu.memory_space<vmem>>, %arg4: memref<1x32xf32, #tpu.memory_space<vmem>>, %arg5: memref<1x4x32xf32, #tpu.memory_space<vmem>>, %arg6: memref<4x32xf32, #tpu.memory_space<vmem>>, %arg7: memref<4x32xf32, #tpu.memory_space<vmem>>) attributes {dimension_semantics = [#tpu.dimension_semantics<arbitrary>], iteration_bounds = array<i64: 8>, scalar_prefetch = 0 : i64, scratch_operands = 1 : i64, tpu.core_type = #tpu.core_type<tc>, window_params = [{transform_indices = @transform_0, window_bounds = array<i64: 1, 4, 96>}, {transform_indices = @transform_1, window_bounds = array<i64: 1, 4, 1>}, {pipeline_mode = #tpu.pipeline_mode<synchronous>, transform_indices = @transform_2, window_bounds = array<i64: 32, 96>}, {pipeline_mode = #tpu.pipeline_mode<synchronous>, transform_indices = @transform_3, window_bounds = array<i64: 1, 32>}, {transform_indices = @transform_4, window_bounds = array<i64: 1, 4, 32>}, {pipeline_mode = #tpu.pipeline_mode<synchronous>, transform_indices = @transform_5, window_bounds = array<i64: 4, 32>}]} {
    %c0_i32 = arith.constant 0 : i32
    %0 = arith.cmpi eq, %arg0, %c0_i32 : i32
    %1 = arith.extui %0 : i1 to i32
    %c0_i32_0 = arith.constant 0 : i32
    %2 = arith.cmpi ne, %1, %c0_i32_0 : i32
    scf.if %2 {
      %cst_22 = arith.constant 0.000000e+00 : f32
      %55 = vector.broadcast %cst_22 : f32 to vector<4x32xf32>
      %c0_23 = arith.constant 0 : index
      %c0_24 = arith.constant 0 : index
      %56 = vector.load %arg7[%c0_23, %c0_24] : memref<4x32xf32, #tpu.memory_space<vmem>>, vector<4x32xf32>
      tpu.vector_store %arg7[%c0_23, %c0_24], %55 {strides = array<i32>} : memref<4x32xf32, #tpu.memory_space<vmem>>, vector<4x32xf32>,
    } else {
    }
    %c0 = arith.constant 0 : index
    %c0_1 = arith.constant 0 : index
    %c0_2 = arith.constant 0 : index
    %3 = vector.load %arg1[%c0, %c0_1, %c0_2] : memref<1x4x96xf32, #tpu.memory_space<vmem>>, vector<1x4x96xf32>
    %4 = vector.shape_cast %3 : vector<1x4x96xf32> to vector<4x96xf32>
    %c0_3 = arith.constant 0 : index
    %c0_4 = arith.constant 0 : index
    %5 = vector.load %arg7[%c0_3, %c0_4] : memref<4x32xf32, #tpu.memory_space<vmem>>, vector<4x32xf32>
    %c0_5 = arith.constant 0 : index
    %c0_6 = arith.constant 0 : index
    %c0_7 = arith.constant 0 : index
    %6 = vector.load %arg2[%c0_5, %c0_6, %c0_7] : memref<1x4x1xf32, #tpu.memory_space<vmem>>, vector<1x4x1xf32>
    %7 = vector.shape_cast %6 : vector<1x4x1xf32> to vector<4x1xf32>
    %c0_8 = arith.constant 0 : index
    %c0_9 = arith.constant 0 : index
    %8 = vector.load %arg3[%c0_8, %c0_9] : memref<32x96xf32, #tpu.memory_space<vmem>>, vector<32x96xf32>
    %cst = arith.constant dense<0.000000e+00> : vector<4x96xf32>
    %9 = tpu.matmul %5, %8, %cst {dimension_numbers = #tpu.dot_dimension_numbers<[1], [0], [0], [1], [0, 0, 1, 1], [], []>} : vector<4x32xf32>, vector<32x96xf32>, vector<4x96xf32> -> vector<4x96xf32>
    %10 = vector.extract_strided_slice %4 {offsets = [0, 0], sizes = [4, 32], strides = [1, 1]} : vector<4x96xf32> to vector<4x32xf32>
    %11 = vector.extract_strided_slice %9 {offsets = [0, 0], sizes = [4, 32], strides = [1, 1]} : vector<4x96xf32> to vector<4x32xf32>
    %12 = arith.addf %10, %11 : vector<4x32xf32>
    %13 = arith.negf %12 : vector<4x32xf32>
    %14 = math.exp %13 : vector<4x32xf32>
    %cst_10 = arith.constant 1.000000e+00 : f32
    %15 = vector.broadcast %cst_10 : f32 to vector<4x32xf32>
    %16 = arith.addf %15, %14 : vector<4x32xf32>
    %17 = arith.divf %15, %16 : vector<4x32xf32>
    %18 = vector.extract_strided_slice %4 {offsets = [0, 32], sizes = [4, 32], strides = [1, 1]} : vector<4x96xf32> to vector<4x32xf32>
    %19 = vector.extract_strided_slice %9 {offsets = [0, 32], sizes = [4, 32], strides = [1, 1]} : vector<4x96xf32> to vector<4x32xf32>
    %20 = arith.addf %18, %19 : vector<4x32xf32>
    %21 = arith.negf %20 : vector<4x32xf32>
    %22 = math.exp %21 : vector<4x32xf32>
    %cst_11 = arith.constant 1.000000e+00 : f32
    %23 = vector.broadcast %cst_11 : f32 to vector<4x32xf32>
    %24 = arith.addf %23, %22 : vector<4x32xf32>
    %25 = arith.divf %23, %24 : vector<4x32xf32>
    %26 = vector.extract_strided_slice %4 {offsets = [0, 64], sizes = [4, 32], strides = [1, 1]} : vector<4x96xf32> to vector<4x32xf32>
    %27 = vector.extract_strided_slice %9 {offsets = [0, 64], sizes = [4, 32], strides = [1, 1]} : vector<4x96xf32> to vector<4x32xf32>
    %c0_12 = arith.constant 0 : index
    %c0_13 = arith.constant 0 : index
    %28 = vector.load %arg4[%c0_12, %c0_13] : memref<1x32xf32, #tpu.memory_space<vmem>>, vector<1x32xf32>
    %29 = vector.broadcast %28 : vector<1x32xf32> to vector<4x32xf32>
    %30 = arith.addf %27, %29 : vector<4x32xf32>
    %31 = arith.mulf %17, %30 : vector<4x32xf32>
    %32 = arith.addf %26, %31 : vector<4x32xf32>
    %33 = math.tanh %32 : vector<4x32xf32>
    %cst_14 = arith.constant 1.000000e+00 : f32
    %34 = vector.broadcast %cst_14 : f32 to vector<4x32xf32>
    %35 = arith.subf %34, %25 : vector<4x32xf32>
    %36 = arith.mulf %35, %33 : vector<4x32xf32>
    %37 = arith.mulf %25, %5 : vector<4x32xf32>
    %38 = arith.addf %36, %37 : vector<4x32xf32>
    %39 = vector.broadcast %7 : vector<4x1xf32> to vector<4x32xf32>
    %40 = arith.mulf %39, %38 : vector<4x32xf32>
    %cst_15 = arith.constant 1.000000e+00 : f32
    %41 = vector.broadcast %cst_15 : f32 to vector<4x1xf32>
    %42 = arith.subf %41, %7 : vector<4x1xf32>
    %43 = vector.broadcast %42 : vector<4x1xf32> to vector<4x32xf32>
    %44 = arith.mulf %43, %5 : vector<4x32xf32>
    %45 = arith.addf %40, %44 : vector<4x32xf32>
    %46 = vector.broadcast %7 : vector<4x1xf32> to vector<4x32xf32>
    %47 = arith.mulf %46, %38 : vector<4x32xf32>
    %c0_16 = arith.constant 0 : index
    %c0_17 = arith.constant 0 : index
    %c0_18 = arith.constant 0 : index
    %48 = vector.load %arg5[%c0_16, %c0_17, %c0_18] : memref<1x4x32xf32, #tpu.memory_space<vmem>>, vector<1x4x32xf32>
    %49 = vector.shape_cast %48 : vector<1x4x32xf32> to vector<4x32xf32>
    %50 = vector.shape_cast %47 : vector<4x32xf32> to vector<1x4x32xf32>
    tpu.vector_store %arg5[%c0_16, %c0_17, %c0_18], %50 {strides = array<i32>} : memref<1x4x32xf32, #tpu.memory_space<vmem>>, vector<1x4x32xf32>,
    %c0_19 = arith.constant 0 : index
    %c0_20 = arith.constant 0 : index
    %51 = vector.load %arg7[%c0_19, %c0_20] : memref<4x32xf32, #tpu.memory_space<vmem>>, vector<4x32xf32>
    tpu.vector_store %arg7[%c0_19, %c0_20], %45 {strides = array<i32>} : memref<4x32xf32, #tpu.memory_space<vmem>>, vector<4x32xf32>,
    %c7_i32 = arith.constant 7 : i32
    %52 = arith.cmpi eq, %arg0, %c7_i32 : i32
    %53 = arith.extui %52 : i1 to i32
    %c0_i32_21 = arith.constant 0 : i32
    %54 = arith.cmpi ne, %53, %c0_i32_21 : i32
    scf.if %54 {
      %c0_22 = arith.constant 0 : index
      %c0_23 = arith.constant 0 : index
      %55 = vector.load %arg6[%c0_22, %c0_23] : memref<4x32xf32, #tpu.memory_space<vmem>>, vector<4x32xf32>
      tpu.vector_store %arg6[%c0_22, %c0_23], %45 {strides = array<i32>} : memref<4x32xf32, #tpu.memory_space<vmem>>, vector<4x32xf32>,
    } else {
    }
    return
  }
  func.func @transform_0(%arg0: i32) -> (i32, i32, i32) {
    %c0_i32 = arith.constant 0 : i32
    %c0_i32_0 = arith.constant 0 : i32
    %c0_i32_1 = arith.constant 0 : i32
    return %arg0, %c0_i32, %c0_i32_0 : i32, i32, i32
  }
  func.func @transform_1(%arg0: i32) -> (i32, i32, i32) {
    %c0_i32 = arith.constant 0 : i32
    %c0_i32_0 = arith.constant 0 : i32
    %c0_i32_1 = arith.constant 0 : i32
    return %arg0, %c0_i32, %c0_i32_0 : i32, i32, i32
  }
  func.func @transform_2(%arg0: i32) -> (i32, i32) {
    %c0_i32 = arith.constant 0 : i32
    %c0_i32_0 = arith.constant 0 : i32
    %c0_i32_1 = arith.constant 0 : i32
    return %c0_i32, %c0_i32_0 : i32, i32
  }
  func.func @transform_3(%arg0: i32) -> (i32, i32) {
    %c0_i32 = arith.constant 0 : i32
    %c0_i32_0 = arith.constant 0 : i32
    %c0_i32_1 = arith.constant 0 : i32
    return %c0_i32, %c0_i32_0 : i32, i32
  }
  func.func @transform_4(%arg0: i32) -> (i32, i32, i32) {
    %c0_i32 = arith.constant 0 : i32
    %c0_i32_0 = arith.constant 0 : i32
    %c0_i32_1 = arith.constant 0 : i32
    return %arg0, %c0_i32, %c0_i32_0 : i32, i32, i32
  }
  func.func @transform_5(%arg0: i32) -> (i32, i32) {
    %c0_i32 = arith.constant 0 : i32
    %c0_i32_0 = arith.constant 0 : i32
    %c0_i32_1 = arith.constant 0 : i32
    return %c0_i32, %c0_i32_0 : i32, i32
  }
}

</mosaic_0001>

<llo_original>
// kernel: tpu_custom_call.1
$region0: #{tpu_custom_call.1}
  #allocation0 [shape = 'u32[]', space=smem, size = 0x4, offset = 0x4, fixed_abs, tag = 'smem constant byte address 0x4 - core index']
  #allocation1 [shape = 'u32[144,128]{1,0:T(1,128)}', space=vmem, size = 0x12000, scoped, tag = 'internal scratch']
  #allocation2 [shape = 'f32[4,32]{1,0:T(4,128)}', space=vmem, size = 0x800, scoped, tag = 'scratch operand']
  %s0 = inlined_call_operand.vmem [shape: f32[8,4,96], index: 0, kind: input, shape index: {}]
  %s1 = inlined_call_operand.vmem [shape: f32[8,4,1], index: 1, kind: input, shape index: {}]
  %s2 = inlined_call_operand.hbm [shape: f32[32,96], index: 2, kind: input, shape index: {}]
  %s3 = inlined_call_operand.vmem [shape: f32[1,32], index: 3, kind: input, shape index: {}]
  %s4 = inlined_call_operand.hbm [shape: f32[8,4,32], index: 4, kind: output, shape index: {0}]
  %s5 = inlined_call_operand.hbm [shape: f32[4,32], index: 5, kind: output, shape index: {1}]
  %6 = xla_tuple %s4, %s5
  %s7 = sld [smem:[#allocation0]]
  $region69: #{tpu_custom_call.1} parent=0
    _
  %s9 = ssub.s32 1, %s7
  %s10 = scalar_select 0, %s9, %s7
  $region1: #{tpu_custom_call.1} parent=0
    #allocation3 [shape = 'u8[16384]{0}', space=vmem, size = 0x4000, scoped, tag = 'input window, operand 2, single buffered']
    #allocation4 [shape = 's32[2]{0}', space=sflag, size = 0x8, scoped, tag = 'scoped memory for tpu_custom_call.1']
    #allocation5 [shape = 's32[2]{0}', space=sflag, size = 0x8, scoped, tag = 'scoped memory for tpu_custom_call.1']
    #allocation6 [shape = 'u8[4096]{0}', space=vmem, size = 0x1000, scoped, tag = 'output window, operand 0']
    #allocation7 [shape = 'u8[2048]{0}', space=vmem, size = 0x800, scoped, tag = 'output window, operand 1, single buffered']
    #allocation8 [shape = 's32[1]{0}', space=sflag, size = 0x4, scoped, tag = 'scoped memory for tpu_custom_call.1']
    %11 = vsyncpa [#allocation4], 0
    %12 = vsyncpa [#allocation5], 0
    %s13 = scalar_lea.sflag [#allocation5], 1
    %14 = vsyncpa %s13, 0
    %15 = vsyncpa [#allocation8], 0
    loop: start=0, step=1, limit=10
    $region2: #{tpu_custom_call.1} parent=1 // loop_pre_header
      _
    $region3: #{tpu_custom_call.1} parent=1 // loop_header
      %s17 = sphi 0, %s21
      %p18 = scmp.ge.s32.totalorder %s17, 10
      %s27 = sphi 0, %s29
      %s30 = sphi 0, %s27
      %s31 = sphi 0, %s30
      %s47 = sphi 0, %s31
      %s53 = sphi 0, %s55
      %s56 = sphi 0, %s53
      %s57 = sphi 0, %s56
      %s73 = sphi 0, %s57
      %s77 = sphi 0, %s77
      %s79 = sphi 0, %s77
      %s80 = sphi 0, %s79
      %s94 = sphi 0, %s80
      %s98 = sphi 0, %s98
      %s100 = sphi 0, %s98
      %s101 = sphi 0, %s100
      %s115 = sphi 0, %s101
      %s121 = sphi 0, %s123
      %s124 = sphi 0, %s121
      %s125 = sphi 0, %s124
      %s141 = sphi 0, %s125
      %s145 = sphi 0, %s145
      %s147 = sphi 0, %s145
      %s148 = sphi 0, %s147
      %s162 = sphi 0, %s148
    $region4: #{tpu_custom_call.1} parent=1 // loop_header_branch
      %20 = sbr.rel (%p18) target = $region8
    $region5: #{tpu_custom_call.1} parent=1 // loop_body
      %s22 = ssub.s32 %s17, 1
      %s23 = ssub.s32 %s17, 2
      %s24 = sadd.s32 %s17, 1
      %s25 = ssub.s32 %s17, %s24
      %p26 = scmp.eq.s32.totalorder %s25, 0
      %s28 = sadd.s32 %s27, 1
      %s29 = scalar_select %p26, %s27, %s28
      %p32 = pneg %p26
      %p33 = scmp.eq.s32.totalorder %s17, 7
      %p34 = por %p32, %p33
      %p35 = scmp.ne.s32.totalorder %s27, %s30
      %p36 = scmp.eq.s32.totalorder %s17, 0
      %p37 = por %p35, %p36
      %p38 = scmp.ne.s32.totalorder %s27, %s30
      %p39 = scmp.eq.s32.totalorder %s22, 7
      %p40 = por %p38, %p39
      %p41 = scmp.ne.s32.totalorder %s30, %s31
      %p42 = scmp.eq.s32.totalorder %s22, 0
      %p43 = por %p41, %p42
      %p44 = scmp.ne.s32.totalorder %s30, %s31
      %p45 = scmp.eq.s32.totalorder %s23, 7
      %p46 = por %p44, %p45
      %p48 = scmp.ne.s32.totalorder %s31, %s47
      %p49 = scmp.eq.s32.totalorder %s23, 0
      %p50 = por %p48, %p49
      %s51 = ssub.s32 %s17, %s24
      %p52 = scmp.eq.s32.totalorder %s51, 0
      %s54 = sadd.s32 %s53, 1
      %s55 = scalar_select %p52, %s53, %s54
      %p58 = pneg %p52
      %p59 = scmp.eq.s32.totalorder %s17, 7
      %p60 = por %p58, %p59
      %p61 = scmp.ne.s32.totalorder %s53, %s56
      %p62 = scmp.eq.s32.totalorder %s17, 0
      %p63 = por %p61, %p62
      %p64 = scmp.ne.s32.totalorder %s53, %s56
      %p65 = scmp.eq.s32.totalorder %s22, 7
      %p66 = por %p64, %p65
      %p67 = scmp.ne.s32.totalorder %s56, %s57
      %p68 = scmp.eq.s32.totalorder %s22, 0
      %p69 = por %p67, %p68
      %p70 = scmp.ne.s32.totalorder %s56, %s57
      %p71 = scmp.eq.s32.totalorder %s23, 7
      %p72 = por %p70, %p71
      %p74 = scmp.ne.s32.totalorder %s57, %s73
      %p75 = scmp.eq.s32.totalorder %s23, 0
      %p76 = por %p74, %p75
      %s78 = sadd.s32 %s77, 1
      %p81 = scmp.eq.s32.totalorder %s17, 7
      %p82 = scmp.ne.s32.totalorder %s77, %s79
      %p83 = scmp.eq.s32.totalorder %s17, 0
      %p84 = por %p82, %p83
      %p85 = scmp.ne.s32.totalorder %s77, %s79
      %p86 = scmp.eq.s32.totalorder %s22, 7
      %p87 = por %p85, %p86
      %p88 = scmp.ne.s32.totalorder %s79, %s80
      %p89 = scmp.eq.s32.totalorder %s22, 0
      %p90 = por %p88, %p89
      %p91 = scmp.ne.s32.totalorder %s79, %s80
      %p92 = scmp.eq.s32.totalorder %s23, 7
      %p93 = por %p91, %p92
      %p95 = scmp.ne.s32.totalorder %s80, %s94
      %p96 = scmp.eq.s32.totalorder %s23, 0
      %p97 = por %p95, %p96
      %s99 = sadd.s32 %s98, 1
      %p102 = scmp.eq.s32.totalorder %s17, 7
      %p103 = scmp.ne.s32.totalorder %s98, %s100
      %p104 = scmp.eq.s32.totalorder %s17, 0
      %p105 = por %p103, %p104
      %p106 = scmp.ne.s32.totalorder %s98, %s100
      %p107 = scmp.eq.s32.totalorder %s22, 7
      %p108 = por %p106, %p107
      %p109 = scmp.ne.s32.totalorder %s100, %s101
      %p110 = scmp.eq.s32.totalorder %s22, 0
      %p111 = por %p109, %p110
      %p112 = scmp.ne.s32.totalorder %s100, %s101
      %p113 = scmp.eq.s32.totalorder %s23, 7
      %p114 = por %p112, %p113
      %p116 = scmp.ne.s32.totalorder %s101, %s115
      %p117 = scmp.eq.s32.totalorder %s23, 0
      %p118 = por %p116, %p117
      %s119 = ssub.s32 %s17, %s24
      %p120 = scmp.eq.s32.totalorder %s119, 0
      %s122 = sadd.s32 %s121, 1
      %s123 = scalar_select %p120, %s121, %s122
      %p126 = pneg %p120
      %p127 = scmp.eq.s32.totalorder %s17, 7
      %p128 = por %p126, %p127
      %p129 = scmp.ne.s32.totalorder %s121, %s124
      %p130 = scmp.eq.s32.totalorder %s17, 0
      %p131 = por %p129, %p130
      %p132 = scmp.ne.s32.totalorder %s121, %s124
      %p133 = scmp.eq.s32.totalorder %s22, 7
      %p134 = por %p132, %p133
      %p135 = scmp.ne.s32.totalorder %s124, %s125
      %p136 = scmp.eq.s32.totalorder %s22, 0
      %p137 = por %p135, %p136
      %p138 = scmp.ne.s32.totalorder %s124, %s125
      %p139 = scmp.eq.s32.totalorder %s23, 7
      %p140 = por %p138, %p139
      %p142 = scmp.ne.s32.totalorder %s125, %s141
      %p143 = scmp.eq.s32.totalorder %s23, 0
      %p144 = por %p142, %p143
      %s146 = sadd.s32 %s145, 1
      %p149 = scmp.eq.s32.totalorder %s17, 7
      %p150 = scmp.ne.s32.totalorder %s145, %s147
      %p151 = scmp.eq.s32.totalorder %s17, 0
      %p152 = por %p150, %p151
      %p153 = scmp.ne.s32.totalorder %s145, %s147
      %p154 = scmp.eq.s32.totalorder %s22, 7
      %p155 = por %p153, %p154
      %p156 = scmp.ne.s32.totalorder %s147, %s148
      %p157 = scmp.eq.s32.totalorder %s22, 0
      %p158 = por %p156, %p157
      %p159 = scmp.ne.s32.totalorder %s147, %s148
      %p160 = scmp.eq.s32.totalorder %s23, 7
      %p161 = por %p159, %p160
      %p163 = scmp.ne.s32.totalorder %s148, %s162
      %p164 = scmp.eq.s32.totalorder %s23, 0
      %p165 = por %p163, %p164
      %p166 = scmp.le.s32.totalorder 1, %s17
      %p167 = scmp.lt.s32.totalorder %s17, 9
      %p168 = pnand %p166, %p167
      %p169 = pneg %p168
      // Predicated region
      $region9: #{tpu_custom_call.1} parent=5 // pred_check
        _
      $region10: #{tpu_custom_call.1} parent=5 // pred_check_branch
        %171 = sbr.rel (%p168) target = $region12
      $region11: #{tpu_custom_call.1} parent=5 // pred_region
        %s172 = ssub.s32 %s17, 1
        // Predicated region
        $region13: #{tpu_custom_call.1} parent=11 // pred_check
          %p173 = pneg %p90
        $region14: #{tpu_custom_call.1} parent=11 // pred_check_branch
          %175 = sbr.rel (%p173) target = $region16
        $region15: #{tpu_custom_call.1} parent=11 // pred_region
          %s177 = ssub.s32 512, 512
          %178 = vsyncadd [#allocation4], %s177
          %s179 = sshll.u32 [#allocation3], 4
          %s180 = int_to_ptr.vmem [resolvable:$true] %s179
          %185 = dma.hbm_to_vmem [thread:$0]  %s2, 512, %s180, [#allocation4], 128, 128, 8
        $region16: #{tpu_custom_call.1} parent=11 // pred_fallthru
          _
        // Predicated region
        $region17: #{tpu_custom_call.1} parent=11 // pred_check
          %p186 = pneg %p111
        $region18: #{tpu_custom_call.1} parent=11 // pred_check_branch
          %188 = sbr.rel (%p186) target = $region20
        $region19: #{tpu_custom_call.1} parent=11 // pred_region
          _
        $region20: #{tpu_custom_call.1} parent=11 // pred_fallthru
          _
      $region12: #{tpu_custom_call.1} parent=5 // pred_fallthru
        _
      %p189 = scmp.lt.s32.totalorder %s17, 8
      // Predicated region
      $region21: #{tpu_custom_call.1} parent=5 // pred_check
        %p190 = pneg %p189
      $region22: #{tpu_custom_call.1} parent=5 // pred_check_branch
        %192 = sbr.rel (%p190) target = $region24
      $region23: #{tpu_custom_call.1} parent=5 // pred_region
        // Predicated region
        $region25: #{tpu_custom_call.1} parent=23 // pred_check
          %p193 = pneg %p37
        $region26: #{tpu_custom_call.1} parent=23 // pred_check_branch
          %195 = sbr.rel (%p193) target = $region28
        $region27: #{tpu_custom_call.1} parent=23 // pred_region
          %p196 = scmp.lt.s32.totalorder %s17, 7
          %s197 = scalar_select %p196, %s17, 7
          %s198 = smul.addr %s197, 4
          %s199 = scalar_lea.vmem %s0, %s198
        $region28: #{tpu_custom_call.1} parent=23 // pred_fallthru
          _
        // Predicated region
        $region29: #{tpu_custom_call.1} parent=23 // pred_check
          %p200 = pneg %p63
        $region30: #{tpu_custom_call.1} parent=23 // pred_check_branch
          %202 = sbr.rel (%p200) target = $region32
        $region31: #{tpu_custom_call.1} parent=23 // pred_region
          %p203 = scmp.lt.s32.totalorder %s17, 7
          %s204 = scalar_select %p203, %s17, 7
          %s205 = smul.addr %s204, 4
          %s206 = scalar_lea.vmem %s1, %s205
        $region32: #{tpu_custom_call.1} parent=23 // pred_fallthru
          _
      $region24: #{tpu_custom_call.1} parent=5 // pred_fallthru
        _
      %p207 = scmp.le.s32.totalorder 1, %s17
      %p208 = scmp.lt.s32.totalorder %s17, 9
      %p209 = pnand %p207, %p208
      %p210 = pneg %p209
      // Predicated region
      $region33: #{tpu_custom_call.1} parent=5 // pred_check
        _
      $region34: #{tpu_custom_call.1} parent=5 // pred_check_branch
        %212 = sbr.rel (%p209) target = $region36
      $region35: #{tpu_custom_call.1} parent=5 // pred_region
        %s213 = ssub.s32 %s17, 1
        // Predicated region
        $region37: #{tpu_custom_call.1} parent=35 // pred_check
          %p214 = pneg %p90
        $region38: #{tpu_custom_call.1} parent=35 // pred_check_branch
          %216 = sbr.rel (%p214) target = $region40
        $region39: #{tpu_custom_call.1} parent=35 // pred_region
          %217 = dma.done [#allocation4], 512
        $region40: #{tpu_custom_call.1} parent=35 // pred_fallthru
          _
        %p218 = scmp.lt.s32.totalorder %s22, 7
        %s219 = scalar_select %p218, %s22, 7
        %s220 = smul.addr %s219, 4
        %s221 = scalar_lea.vmem %s0, %s220
        %p222 = pneg %p43
        %p223 = pneg %p40
        %p224 = scmp.lt.s32.totalorder %s22, 7
        %s225 = scalar_select %p224, %s22, 7
        %s226 = smul.addr %s225, 4
        %s227 = scalar_lea.vmem %s1, %s226
        %p228 = pneg %p69
        %p229 = pneg %p66
        %p230 = pneg %p90
        %p231 = pneg %p87
        %p232 = pneg %p111
        %p233 = pneg %p108
        %p234 = pneg %p137
        %p235 = pneg %p134
        %s236 = sand.u32 %s124, 1
        %s237 = scalar_lea.sflag [#allocation5], %s236
        %s238 = sand.u32 %s124, 1
        %s239 = smul.addr %s238, 4
        %s240 = scalar_lea.vmem [#allocation6], %s239
        %p241 = pneg %p158
        %p242 = pneg %p155
        %p243 = scmp.lt.s32.totalorder %s22, 7
        %s244 = scalar_select %p243, %s22, 7
        %s245 = smul.addr %s244, 4
        %s246 = scalar_lea.vmem %s0, %s245
        %p247 = scmp.lt.s32.totalorder %s22, 7
        %s248 = scalar_select %p247, %s22, 7
        %s249 = smul.addr %s248, 4
        %s250 = scalar_lea.vmem %s1, %s249
        %p251 = scmp.eq.s32.totalorder %s22, 0
        // Predicated region
        $region41: #{tpu_custom_call.1} parent=35 // pred_check
          %p252 = pneg %p251
        $region42: #{tpu_custom_call.1} parent=35 // pred_check_branch
          %254 = sbr.rel (%p252) target = $region44
        $region43: #{tpu_custom_call.1} parent=35 // pred_region
          %vm255 = vcmask 257024
          %256 = vst.msk [vmem:[#allocation2] sm:$0xf] %vm255, 0.0
        $region44: #{tpu_custom_call.1} parent=35 // pred_fallthru
          _
        %v257 = vld [vmem:[%s246] sm:$0xf]
        %v258 = vld [vmem:[#allocation2] sm:$0xf]
        %v259 = vld [vmem:[%s250] sm:$0xf]
        %v260 = vld [vmem:[#allocation3] sm:$0xff]
        %v261 = vld [vmem:[#allocation3 + $0x8] sm:$0xff]
        %v262 = vld [vmem:[#allocation3 + $0x10] sm:$0xff]
        %v263 = vld [vmem:[#allocation3 + $0x18] sm:$0xff]
        %vm264 = vcmask 261120
        %v266 = vsel %vm264, %v258, 0
        %268 = vmatprep.subr.mxu0 0.0
        %269 = vmatpush1.msra.mxu0 %v260
        %270 = vmatprep.subr.mxu0 0.0
        %271 = vmatpush1.msra.mxu0 %v261
        %272 = vmatprep.subr.mxu0 0.0
        %273 = vmatpush1.msra.mxu0 %v262
        %274 = vmatprep.subr.mxu0 0.0
        %275 = vmatpush1.msra.mxu0 %v263
        %276 = vmatprep.subr.mxu0 0.0
        %277 = vmatpush1.msra.mxu0 0.0
        %278 = vmatprep.subr.mxu0 0.0
        %279 = vmatpush1.msra.mxu0 0.0
        %280 = vmatprep.subr.mxu0 0.0
        %281 = vmatpush1.msra.mxu0 0.0
        %282 = vmatprep.subr.mxu0 0.0
        %283 = vmatpush1.msra.mxu0 0.0
        %284 = vmatprep.subr.mxu0 0.0
        %285 = vmatpush1.msra.mxu0 0.0
        %286 = vmatprep.subr.mxu0 0.0
        %287 = vmatpush1.msra.mxu0 0.0
        %288 = vmatprep.subr.mxu0 0.0
        %289 = vmatpush1.msra.mxu0 0.0
        %290 = vmatprep.subr.mxu0 0.0
        %291 = vmatpush1.msra.mxu0 0.0
        %292 = vmatprep.subr.mxu0 0.0
        %293 = vmatpush1.msra.mxu0 0.0
        %294 = vmatprep.subr.mxu0 0.0
        %295 = vmatpush1.msra.mxu0 0.0
        %296 = vmatprep.subr.mxu0 0.0
        %297 = vmatpush1.msra.mxu0 0.0
        %298 = vmatprep.subr.mxu0 0.0
        %299 = vmatpush1.msra.mxu0 0.0
        %300 = vmatprep.subr.mxu0 0.0
        %301 = vmatpush1.msra.mxu0 0.0
        %302 = vmatprep.subr.mxu0 0.0
        %303 = vmatpush1.msra.mxu0 0.0
        %304 = vmatprep.subr.mxu0 0.0
        %305 = vmatpush1.msra.mxu0 0.0
        %306 = vmatprep.subr.mxu0 0.0
        %307 = vmatpush1.msra.mxu0 0.0
        %308 = vmatprep.subr.mxu0 0.0
        %309 = vmatpush1.msra.mxu0 0.0
        %310 = vmatprep.subr.mxu0 0.0
        %311 = vmatpush1.msra.mxu0 0.0
        %312 = vmatprep.subr.mxu0 0.0
        %313 = vmatpush1.msra.mxu0 0.0
        %314 = vmatprep.subr.mxu0 0.0
        %315 = vmatpush1.msra.mxu0 0.0
        %316 = vmatprep.subr.mxu0 0.0
        %317 = vmatpush1.msra.mxu0 0.0
        %318 = vmatprep.subr.mxu0 0.0
        %319 = vmatpush1.msra.mxu0 0.0
        %320 = vmatprep.subr.mxu0 0.0
        %321 = vmatpush1.msra.mxu0 0.0
        %322 = vmatprep.subr.mxu0 0.0
        %323 = vmatpush1.msra.mxu0 0.0
        %324 = vmatprep.subr.mxu0 0.0
        %325 = vmatpush1.msra.mxu0 0.0
        %326 = vmatprep.subr.mxu0 0.0
        %327 = vmatpush1.msra.mxu0 0.0
        %328 = vmatprep.subr.mxu0 0.0
        %329 = vmatpush1.msra.mxu0 0.0
        %330 = vmatprep.subr.mxu0 0.0
        %331 = vmatpush1.msra.mxu0 0.0
        %332 = vmatprep.mubr.f32.mxu0 0.0
        %333 = vmatmul.mubr.f32.gmra.mrb[0].mxu0 %v266
        %v334 = vpop.f32.mrb[0].mxu0
        %v335 = vadd.f32 0.0, %v334
        %v336 = vpop.f32.mrb[0].mxu0
        %337 = vdwg.mxu0
        %v338 = vadd.f32 %v257, %v335
        %v339 = vxor.u32 %v338, 2147483648
        %v340 = vmul.f32 %v339, 1.442695
        %v341 = vpow.pop %v340
        %v342 = vadd.f32 %v341, 1.0
        %v343 = vrcp.pop %v342
        %v344 = vmul.f32 1.0, %v343
        %v345 = vld [vmem:[%s3] sm:$0x1]
        %v347 = vlaneseq
        %v348 = vshrl.u32 %v347, 7
        %v349 = vsub.s32 0, %v348
        %v350 = vrot.slane %v345, %v349
        %351 = vrot.lane.b32.xlu0 %v350, 64
        %v352 = vpop.permute.xlu0 %351
        %v354 = vadd.f32 %v335, %v352
        %356 = vrot.lane.b32.xlu0 %v354, 64
        %v357 = vpop.permute.xlu0 %356
        %v359 = vmul.f32 %v344, %v357
        %361 = vrot.lane.b32.xlu0 %v359, 64
        %v362 = vpop.permute.xlu0 %361
        %v364 = vadd.f32 %v257, %v362
        %v365 = vtanh.pop %v364
        %v366 = vsub.f32 1.0, %v344
        %368 = vrot.lane.b32.xlu0 %v365, 96
        %v369 = vpop.permute.xlu0 %368
        %v371 = vmul.f32 %v366, %v369
        %372 = vrot.lane.b32.xlu0 %v258, 32
        %v373 = vpop.permute.xlu0 %372
        %v375 = vmul.f32 %v344, %v373
        %v376 = vadd.f32 %v371, %v375
        %378 = vset.pattern.permute.xlu0 0
        %379 = vperm.xlu0 %378, %v259
        %v380 = vpop.permute.xlu0 %379
        %v382 = vmul.f32 %v380, %v376
        %v383 = vsub.f32 1.0, %v259
        %385 = vset.pattern.permute.xlu0 0
        %386 = vperm.xlu0 %385, %v383
        %v387 = vpop.permute.xlu0 %386
        %v389 = vmul.f32 %v387, %v258
        %391 = vrot.lane.b32.xlu0 %v389, 32
        %v392 = vpop.permute.xlu0 %391
        %v394 = vadd.f32 %v382, %v392
        %396 = vrot.lane.b32.xlu0 %v382, 96
        %v397 = vpop.permute.xlu0 %396
        %vm399 = vcmask 257024
        %400 = vst.msk [vmem:[%s240] sm:$0xf] %vm399, %v397
        %402 = vrot.lane.b32.xlu0 %v394, 96
        %v403 = vpop.permute.xlu0 %402
        %405 = vst.msk [vmem:[#allocation2] sm:$0xf] %vm399, %v403
        %p406 = scmp.eq.s32.totalorder %s22, 7
        // Predicated region
        $region45: #{tpu_custom_call.1} parent=35 // pred_check
          %p407 = pneg %p406
        $region46: #{tpu_custom_call.1} parent=35 // pred_check_branch
          %409 = sbr.rel (%p407) target = $region48
        $region47: #{tpu_custom_call.1} parent=35 // pred_region
          %410 = vst.msk [vmem:[#allocation7] sm:$0xf] %vm399, %v403
        $region48: #{tpu_custom_call.1} parent=35 // pred_fallthru
          _
        %s411 = sand.u32 %s124, 1
        %s412 = scalar_lea.sflag [#allocation5], %s411
        %s413 = sand.u32 %s124, 1
        %s414 = smul.addr %s413, 4
        %s415 = scalar_lea.vmem [#allocation6], %s414
        // Predicated region
        $region49: #{tpu_custom_call.1} parent=35 // pred_check
          %p416 = pneg %p134
        $region50: #{tpu_custom_call.1} parent=35 // pred_check_branch
          %418 = sbr.rel (%p416) target = $region52
        $region51: #{tpu_custom_call.1} parent=35 // pred_region
          %s420 = ssub.s32 64, 64
          %421 = vsyncadd %s412, %s420
          %s422 = smul.addr %s22, 64
          %s423 = scalar_lea.hbm %s4, %s422
          %s425 = sshll.u32 %s415, 4
          %s426 = int_to_ptr.vmem [resolvable:$true] %s425
          %428 = dma.vmem_to_hbm [thread:$0]  %s426, 64, %s423, %s412
        $region52: #{tpu_custom_call.1} parent=35 // pred_fallthru
          _
        // Predicated region
        $region53: #{tpu_custom_call.1} parent=35 // pred_check
          %p429 = pneg %p155
        $region54: #{tpu_custom_call.1} parent=35 // pred_check_branch
          %431 = sbr.rel (%p429) target = $region56
        $region55: #{tpu_custom_call.1} parent=35 // pred_region
          %s433 = ssub.s32 64, 64
          %434 = vsyncadd [#allocation8], %s433
          %s436 = sshll.u32 [#allocation7], 4
          %s437 = int_to_ptr.vmem [resolvable:$true] %s436
          %439 = dma.vmem_to_hbm [thread:$0]  %s437, 64, %s5, [#allocation8]
        $region56: #{tpu_custom_call.1} parent=35 // pred_fallthru
          _
        // Predicated region
        $region57: #{tpu_custom_call.1} parent=35 // pred_check
          %p440 = pneg %p155
        $region58: #{tpu_custom_call.1} parent=35 // pred_check_branch
          %442 = sbr.rel (%p440) target = $region60
        $region59: #{tpu_custom_call.1} parent=35 // pred_region
          %443 = dma.done [#allocation8], 64
        $region60: #{tpu_custom_call.1} parent=35 // pred_fallthru
          _
      $region36: #{tpu_custom_call.1} parent=5 // pred_fallthru
        _
      %p444 = scmp.le.s32.totalorder 2, %s17
      // Predicated region
      $region61: #{tpu_custom_call.1} parent=5 // pred_check
        %p445 = pneg %p444
      $region62: #{tpu_custom_call.1} parent=5 // pred_check_branch
        %447 = sbr.rel (%p445) target = $region64
      $region63: #{tpu_custom_call.1} parent=5 // pred_region
        %s448 = ssub.s32 %s17, 2
        // Predicated region
        $region65: #{tpu_custom_call.1} parent=63 // pred_check
          %p449 = pneg %p140
        $region66: #{tpu_custom_call.1} parent=63 // pred_check_branch
          %451 = sbr.rel (%p449) target = $region68
        $region67: #{tpu_custom_call.1} parent=63 // pred_region
          %s452 = sand.u32 %s125, 1
          %s453 = scalar_lea.sflag [#allocation5], %s452
          %s454 = sand.u32 %s125, 1
          %s455 = smul.addr %s454, 4
          %s456 = scalar_lea.vmem [#allocation6], %s455
          %457 = dma.done %s453, 64
        $region68: #{tpu_custom_call.1} parent=63 // pred_fallthru
          _
      $region64: #{tpu_custom_call.1} parent=5 // pred_fallthru
        _
    $region6: #{tpu_custom_call.1} parent=1 // loop_footer
      %s21 = sadd.s32 1, %s17
    $region7: #{tpu_custom_call.1} parent=1 // loop_footer_branch
      %16 = sbr.rel target = $region3
    $region8: #{tpu_custom_call.1} parent=1 // loop_exit
      _
    %458 = vsyncpa [#allocation4], 1
    %s459 = scalar_lea.sflag [#allocation4], 1
    %460 = vsyncpa %s459, 1
    %461 = vsyncpa [#allocation5], 1
    %s462 = scalar_lea.sflag [#allocation5], 1
    %463 = vsyncpa %s462, 1
    %464 = vsyncpa [#allocation8], 1

</llo_original>
